<compile_context>
chip_gen: v5e
topology: v5e:2x2
jax: 0.10.0
libtpu: 0.0.40
codegen_flags: <defaults>
</compile_context>

<pallas_src>
import functools

import jax
import jax.numpy as jnp
from jax.experimental import pallas as pl
from jax.experimental.pallas import tpu as pltpu


# ----------------------------------------------------------------------------
# Portable in-kernel RNG helpers (VPU/EUP ops only, no TPU-only prng primitives)
# ----------------------------------------------------------------------------

_MIX1 = 0x7FEB352D
_MIX2 = 0x846CA68B
_GOLDEN = 0x9E3779B9


def _hash32(v):
    """lowbias32 integer hash; plain uint32 xor/shift/mul (VPU)."""
    v = v ^ (v >> 16)
    v = v * jnp.uint32(_MIX1)
    v = v ^ (v >> 15)
    v = v * jnp.uint32(_MIX2)
    v = v ^ (v >> 16)
    return v


# Acklam's rational approximation of the inverse normal CDF.
# Only needs one log, one sqrt and one divide per element (no trig).
_ACK_A = (-3.969683028665376e+01, 2.209460984245205e+02, -2.759285104469687e+02,
          1.383577518672690e+02, -3.066479806614716e+01, 2.506628277459239e+00)
_ACK_B = (-5.447609879822406e+01, 1.615858368580409e+02, -1.556989798598866e+02,
          6.680131188771972e+01, -1.328068155288572e+01)
_ACK_C = (-7.784894002430293e-03, -3.223964580411365e-01, -2.400758277161838e+00,
          -2.549732539343734e+00, 4.374664141464968e+00, 2.938163982698783e+00)
_ACK_D = (7.784695709041462e-03, 3.224671290700398e-01, 2.445134137142996e+00,
          3.754408661907416e+00)
_P_TAIL = 0.02425


def _polyval(coeffs, x):
    acc = jnp.full_like(x, coeffs[0])
    for c in coeffs[1:]:
        acc = acc * x + c
    return acc


def _inv_normal_cdf(p):
    """Standard-normal quantile of p in (0, 1); vectorized piecewise rational."""
    q = p - 0.5
    r = q * q
    num_c = q * _polyval(_ACK_A, r)
    den_c = _polyval(_ACK_B, r) * r + 1.0

    t = jnp.where(q < 0.0, p, 1.0 - p)            # distance into the nearer tail
    qt = jnp.sqrt(-2.0 * jnp.log(t))              # finite: t >= 2^-24 by construction
    num_t = jnp.where(q < 0.0, 1.0, -1.0) * _polyval(_ACK_C, qt)
    den_t = _polyval(_ACK_D, qt) * qt + 1.0

    in_tail = t < _P_TAIL
    num = jnp.where(in_tail, num_t, num_c)
    den = jnp.where(in_tail, den_t, den_c)
    return num / den


# ----------------------------------------------------------------------------
# Kernel: one (tb, tt) tile -> out = x + N(0, noise_std) generated on-chip
# ----------------------------------------------------------------------------

def _noise_kernel(seed_ref, nstd_ref, x_ref, o_ref, *, col_stride):
    i = pl.program_id(0)
    j = pl.program_id(1)
    tb, tt = x_ref.shape

    seed = seed_ref[0]         # int32 scalar (SMEM)
    noise_std = nstd_ref[0]    # float32 scalar (SMEM), sampled once per forward

    # Unique 32-bit counter per element of the (padded) global array.
    row = jax.lax.broadcasted_iota(jnp.int32, (tb, tt), 0) + i * tb
    col = jax.lax.broadcasted_iota(jnp.int32, (tb, tt), 1) + j * tt
    ctr = row.astype(jnp.uint32) * jnp.uint32(col_stride) + col.astype(jnp.uint32)

    bits = _hash32(ctr ^ seed.astype(jnp.uint32))
    bits = _hash32(bits ^ jnp.uint32(_GOLDEN))

    # Top 23 bits -> uniform strictly inside (0, 1) so the tail log stays finite.
    u = ((bits >> 9).astype(jnp.int32).astype(jnp.float32) + 0.5) * (1.0 / (1 << 23))

    z = _inv_normal_cdf(u)                      # standard normal (EUP-bound)
    o_ref[...] = x_ref[...] + z * noise_std     # VPU scale+add hides under EUP


# ----------------------------------------------------------------------------
# Wrapper
# ----------------------------------------------------------------------------

@functools.partial(jax.jit, static_argnames=("min_snr", "max_snr", "block_t"))
def _add_noise(feature, key, min_snr, max_snr, block_t):
    x = feature.astype(jnp.float32)
    x2 = x.reshape(-1, x.shape[-1]) if x.ndim != 2 else x
    B, T = x2.shape

    # torch.std default: unbiased (Bessel, N-1).  Cheap XLA reduction, once.
    std = jnp.std(x2, ddof=1)

    k_u, k_s = jax.random.split(key)
    u = jax.random.uniform(k_u, (), jnp.float32)
    # random.uniform(min_snr*std, max_snr*std): exactly one draw per forward.
    noise_std = (min_snr + (max_snr - min_snr) * u) * std
    seed = jax.random.randint(k_s, (1,), 0, jnp.iinfo(jnp.int32).max,
                              dtype=jnp.int32)

    # Lane-dense tiles: last dim multiple of 128 (or full extent), second-to-last
    # multiple of 8 (or full extent).  Small enough to stay well under v7x's
    # 32 MiB default scoped VMEM even with double-buffered in+out blocks.
    tb = min(B, 64) if B % 8 == 0 else B
    if T % 128 == 0:
        tt = min(T, block_t)
    else:
        tt = block_t if T > block_t else T
    gb, gt = pl.cdiv(B, tb), pl.cdiv(T, tt)

    kernel = functools.partial(_noise_kernel, col_stride=gt * tt)
    noisy = pl.pallas_call(
        kernel,
        out_shape=jax.ShapeDtypeStruct((B, T), jnp.float32),
        grid=(gb, gt),
        in_specs=[
            pl.BlockSpec(memory_space=pltpu.MemorySpace.SMEM),   # seed (1,) int32
            pl.BlockSpec(memory_space=pltpu.MemorySpace.SMEM),   # noise_std (1,) f32
            pl.BlockSpec((tb, tt), lambda i, j: (i, j)),         # audio tile
        ],
        out_specs=pl.BlockSpec((tb, tt), lambda i, j: (i, j)),
        compiler_params=pltpu.CompilerParams(
            # std/noise_std are precomputed, so every tile is independent:
            # lets v7x's two TensorCores split the grid; harmless on v5e/v6e.
            dimension_semantics=("parallel", "parallel"),
        ),
    )(seed, noise_std.reshape(1).astype(jnp.float32), x2)

    return noisy.reshape(feature.shape)


def noise_forward(au, key, *, min_snr=0.001, max_snr=1.0, block_t=2048):
    """Pallas equivalent of Noise.forward; au = {'feature', 'emotion'}."""
    noisy = _add_noise(au["feature"], key, min_snr=min_snr, max_snr=max_snr,
                       block_t=block_t)
    # 'emotion' is passed through untouched (no compute in the torch module).
    return {"feature": noisy, "emotion": au["emotion"]}


if __name__ == "__main__":
    key = jax.random.PRNGKey(0)
    k_feat, k_emo, k_noise = jax.random.split(key, 3)

    B, T = 8, 1024  # small audio-feature batch; time maps to the lane axis
    feature = jax.random.normal(k_feat, (B, T), dtype=jnp.float32) * 0.5
    emotion = jax.random.randint(k_emo, (B,), 0, 7, dtype=jnp.int32)

    au = {"feature": feature, "emotion": emotion}
    # block_t=256 exercises a multi-tile grid (grid = (1, 4)) at this small size.
    out = noise_forward(au, k_noise, min_snr=0.001, max_snr=1.0, block_t=256)

    jax.block_until_ready(out["feature"])
    jax.block_until_ready(out["emotion"])

    # Sanity: shape/dtype preserved, emotion passed through, noise bounded.
    assert out["feature"].shape == feature.shape
    assert out["feature"].dtype == jnp.float32
    assert bool(jnp.all(out["emotion"] == emotion))
    assert bool(jnp.all(jnp.isfinite(out["feature"])))

    std = jnp.std(feature, ddof=1)
    diff = out["feature"] - feature
    diff_std = jnp.std(diff)
    assert bool(diff_std > 0.0)
    assert bool(diff_std <= 1.5 * std)   # noise_std <= max_snr * std (with slack)

    print("KERNEL_OK")
</pallas_src>

<mosaic_0001>
module attributes {stable_mosaic.version = 11 : i64} {
  func.func @_noise_kernel(%arg0: i32, %arg1: i32, %arg2: memref<1xi32, #tpu.memory_space<smem>>, %arg3: memref<1xf32, #tpu.memory_space<smem>>, %arg4: memref<8x256xf32, #tpu.memory_space<vmem>>, %arg5: memref<8x256xf32, #tpu.memory_space<vmem>>) attributes {dimension_semantics = [#tpu.dimension_semantics<parallel>, #tpu.dimension_semantics<parallel>], iteration_bounds = array<i64: 1, 4>, scalar_prefetch = 0 : i64, scratch_operands = 0 : i64, tpu.core_type = #tpu.core_type<tc>, window_params = [{transform_indices = @transform_0, window_bounds = array<i64: 1>}, {transform_indices = @transform_1, window_bounds = array<i64: 1>}, {transform_indices = @transform_2, window_bounds = array<i64: 8, 256>}, {transform_indices = @transform_3, window_bounds = array<i64: 8, 256>}]} {
    %c0 = arith.constant 0 : index
    %0 = memref.load %arg2[%c0] : memref<1xi32, #tpu.memory_space<smem>>
    %c0_0 = arith.constant 0 : index
    %1 = memref.load %arg3[%c0_0] : memref<1xf32, #tpu.memory_space<smem>>
    %2 = tpu.iota {dimensions = array<i32: 0>} : vector<8x256xi32>
    %c8_i32 = arith.constant 8 : i32
    %3 = arith.muli %arg0, %c8_i32 : i32
    %4 = vector.broadcast %3 : i32 to vector<8x256xi32>
    %5 = arith.addi %2, %4 : vector<8x256xi32>
    %6 = tpu.iota {dimensions = array<i32: 1>} : vector<8x256xi32>
    %c256_i32 = arith.constant 256 : i32
    %7 = arith.muli %arg1, %c256_i32 : i32
    %8 = vector.broadcast %7 : i32 to vector<8x256xi32>
    %9 = arith.addi %6, %8 : vector<8x256xi32>
    %c1024_i32 = arith.constant 1024 : i32
    %10 = vector.broadcast %c1024_i32 : i32 to vector<8x256xi32>
    %11 = arith.muli %5, %10 : vector<8x256xi32>
    %12 = arith.addi %11, %9 : vector<8x256xi32>
    %13 = vector.broadcast %0 : i32 to vector<8x256xi32>
    %14 = arith.xori %12, %13 : vector<8x256xi32>
    %c16_i32 = arith.constant 16 : i32
    %15 = vector.broadcast %c16_i32 : i32 to vector<8x256xi32>
    %16 = arith.shrui %14, %15 : vector<8x256xi32>
    %17 = arith.xori %14, %16 : vector<8x256xi32>
    %c2146121005_i32 = arith.constant 2146121005 : i32
    %18 = vector.broadcast %c2146121005_i32 : i32 to vector<8x256xi32>
    %19 = arith.muli %17, %18 : vector<8x256xi32>
    %c15_i32 = arith.constant 15 : i32
    %20 = vector.broadcast %c15_i32 : i32 to vector<8x256xi32>
    %21 = arith.shrui %19, %20 : vector<8x256xi32>
    %22 = arith.xori %19, %21 : vector<8x256xi32>
    %c-2073254261_i32 = arith.constant -2073254261 : i32
    %23 = vector.broadcast %c-2073254261_i32 : i32 to vector<8x256xi32>
    %24 = arith.muli %22, %23 : vector<8x256xi32>
    %c16_i32_1 = arith.constant 16 : i32
    %25 = vector.broadcast %c16_i32_1 : i32 to vector<8x256xi32>
    %26 = arith.shrui %24, %25 : vector<8x256xi32>
    %27 = arith.xori %24, %26 : vector<8x256xi32>
    %c-1640531527_i32 = arith.constant -1640531527 : i32
    %28 = vector.broadcast %c-1640531527_i32 : i32 to vector<8x256xi32>
    %29 = arith.xori %27, %28 : vector<8x256xi32>
    %c16_i32_2 = arith.constant 16 : i32
    %30 = vector.broadcast %c16_i32_2 : i32 to vector<8x256xi32>
    %31 = arith.shrui %29, %30 : vector<8x256xi32>
    %32 = arith.xori %29, %31 : vector<8x256xi32>
    %c2146121005_i32_3 = arith.constant 2146121005 : i32
    %33 = vector.broadcast %c2146121005_i32_3 : i32 to vector<8x256xi32>
    %34 = arith.muli %32, %33 : vector<8x256xi32>
    %c15_i32_4 = arith.constant 15 : i32
    %35 = vector.broadcast %c15_i32_4 : i32 to vector<8x256xi32>
    %36 = arith.shrui %34, %35 : vector<8x256xi32>
    %37 = arith.xori %34, %36 : vector<8x256xi32>
    %c-2073254261_i32_5 = arith.constant -2073254261 : i32
    %38 = vector.broadcast %c-2073254261_i32_5 : i32 to vector<8x256xi32>
    %39 = arith.muli %37, %38 : vector<8x256xi32>
    %c16_i32_6 = arith.constant 16 : i32
    %40 = vector.broadcast %c16_i32_6 : i32 to vector<8x256xi32>
    %41 = arith.shrui %39, %40 : vector<8x256xi32>
    %42 = arith.xori %39, %41 : vector<8x256xi32>
    %c9_i32 = arith.constant 9 : i32
    %43 = vector.broadcast %c9_i32 : i32 to vector<8x256xi32>
    %44 = arith.shrui %42, %43 : vector<8x256xi32>
    %45 = arith.sitofp %44 : vector<8x256xi32> to vector<8x256xf32>
    %cst = arith.constant 5.000000e-01 : f32
    %46 = vector.broadcast %cst : f32 to vector<8x256xf32>
    %47 = arith.addf %45, %46 : vector<8x256xf32>
    %cst_7 = arith.constant 1.1920929E-7 : f32
    %48 = vector.broadcast %cst_7 : f32 to vector<8x256xf32>
    %49 = arith.mulf %47, %48 : vector<8x256xf32>
    %cst_8 = arith.constant 5.000000e-01 : f32
    %50 = vector.broadcast %cst_8 : f32 to vector<8x256xf32>
    %51 = arith.subf %49, %50 : vector<8x256xf32>
    %52 = arith.mulf %51, %51 : vector<8x256xf32>
    %cst_9 = arith.constant -39.6968307 : f32
    %53 = vector.broadcast %cst_9 : f32 to vector<8x256xf32>
    %54 = arith.mulf %53, %52 : vector<8x256xf32>
    %cst_10 = arith.constant 220.946106 : f32
    %55 = vector.broadcast %cst_10 : f32 to vector<8x256xf32>
    %56 = arith.addf %54, %55 : vector<8x256xf32>
    %57 = arith.mulf %56, %52 : vector<8x256xf32>
    %cst_11 = arith.constant -275.928497 : f32
    %58 = vector.broadcast %cst_11 : f32 to vector<8x256xf32>
    %59 = arith.addf %57, %58 : vector<8x256xf32>
    %60 = arith.mulf %59, %52 : vector<8x256xf32>
    %cst_12 = arith.constant 138.357758 : f32
    %61 = vector.broadcast %cst_12 : f32 to vector<8x256xf32>
    %62 = arith.addf %60, %61 : vector<8x256xf32>
    %63 = arith.mulf %62, %52 : vector<8x256xf32>
    %cst_13 = arith.constant -30.6647987 : f32
    %64 = vector.broadcast %cst_13 : f32 to vector<8x256xf32>
    %65 = arith.addf %63, %64 : vector<8x256xf32>
    %66 = arith.mulf %65, %52 : vector<8x256xf32>
    %cst_14 = arith.constant 2.50662827 : f32
    %67 = vector.broadcast %cst_14 : f32 to vector<8x256xf32>
    %68 = arith.addf %66, %67 : vector<8x256xf32>
    %69 = arith.mulf %51, %68 : vector<8x256xf32>
    %cst_15 = arith.constant -54.4760971 : f32
    %70 = vector.broadcast %cst_15 : f32 to vector<8x256xf32>
    %71 = arith.mulf %70, %52 : vector<8x256xf32>
    %cst_16 = arith.constant 161.585831 : f32
    %72 = vector.broadcast %cst_16 : f32 to vector<8x256xf32>
    %73 = arith.addf %71, %72 : vector<8x256xf32>
    %74 = arith.mulf %73, %52 : vector<8x256xf32>
    %cst_17 = arith.constant -155.698975 : f32
    %75 = vector.broadcast %cst_17 : f32 to vector<8x256xf32>
    %76 = arith.addf %74, %75 : vector<8x256xf32>
    %77 = arith.mulf %76, %52 : vector<8x256xf32>
    %cst_18 = arith.constant 66.8013153 : f32
    %78 = vector.broadcast %cst_18 : f32 to vector<8x256xf32>
    %79 = arith.addf %77, %78 : vector<8x256xf32>
    %80 = arith.mulf %79, %52 : vector<8x256xf32>
    %cst_19 = arith.constant -13.2806816 : f32
    %81 = vector.broadcast %cst_19 : f32 to vector<8x256xf32>
    %82 = arith.addf %80, %81 : vector<8x256xf32>
    %83 = arith.mulf %82, %52 : vector<8x256xf32>
    %cst_20 = arith.constant 1.000000e+00 : f32
    %84 = vector.broadcast %cst_20 : f32 to vector<8x256xf32>
    %85 = arith.addf %83, %84 : vector<8x256xf32>
    %cst_21 = arith.constant 0.000000e+00 : f32
    %86 = vector.broadcast %cst_21 : f32 to vector<8x256xf32>
    %87 = arith.cmpf olt, %51, %86 : vector<8x256xf32>
    %cst_22 = arith.constant 1.000000e+00 : f32
    %88 = vector.broadcast %cst_22 : f32 to vector<8x256xf32>
    %89 = arith.subf %88, %49 : vector<8x256xf32>
    %90 = arith.select %87, %49, %89 : vector<8x256xi1>, vector<8x256xf32>
    %91 = math.log %90 : vector<8x256xf32>
    %cst_23 = arith.constant -2.000000e+00 : f32
    %92 = vector.broadcast %cst_23 : f32 to vector<8x256xf32>
    %93 = arith.mulf %92, %91 : vector<8x256xf32>
    %94 = math.sqrt %93 : vector<8x256xf32>
    %cst_24 = arith.constant 0.000000e+00 : f32
    %95 = vector.broadcast %cst_24 : f32 to vector<8x256xf32>
    %96 = arith.cmpf olt, %51, %95 : vector<8x256xf32>
    %cst_25 = arith.constant 1.000000e+00 : f32
    %cst_26 = arith.constant -1.000000e+00 : f32
    %97 = vector.broadcast %cst_25 : f32 to vector<8x256xf32>
    %98 = vector.broadcast %cst_26 : f32 to vector<8x256xf32>
    %99 = arith.select %96, %97, %98 : vector<8x256xi1>, vector<8x256xf32>
    %cst_27 = arith.constant -0.0077848942 : f32
    %100 = vector.broadcast %cst_27 : f32 to vector<8x256xf32>
    %101 = arith.mulf %100, %94 : vector<8x256xf32>
    %cst_28 = arith.constant -0.322396457 : f32
    %102 = vector.broadcast %cst_28 : f32 to vector<8x256xf32>
    %103 = arith.addf %101, %102 : vector<8x256xf32>
    %104 = arith.mulf %103, %94 : vector<8x256xf32>
    %cst_29 = arith.constant -2.40075827 : f32
    %105 = vector.broadcast %cst_29 : f32 to vector<8x256xf32>
    %106 = arith.addf %104, %105 : vector<8x256xf32>
    %107 = arith.mulf %106, %94 : vector<8x256xf32>
    %cst_30 = arith.constant -2.54973245 : f32
    %108 = vector.broadcast %cst_30 : f32 to vector<8x256xf32>
    %109 = arith.addf %107, %108 : vector<8x256xf32>
    %110 = arith.mulf %109, %94 : vector<8x256xf32>
    %cst_31 = arith.constant 4.37466431 : f32
    %111 = vector.broadcast %cst_31 : f32 to vector<8x256xf32>
    %112 = arith.addf %110, %111 : vector<8x256xf32>
    %113 = arith.mulf %112, %94 : vector<8x256xf32>
    %cst_32 = arith.constant 2.938164 : f32
    %114 = vector.broadcast %cst_32 : f32 to vector<8x256xf32>
    %115 = arith.addf %113, %114 : vector<8x256xf32>
    %116 = arith.mulf %99, %115 : vector<8x256xf32>
    %cst_33 = arith.constant 0.00778469583 : f32
    %117 = vector.broadcast %cst_33 : f32 to vector<8x256xf32>
    %118 = arith.mulf %117, %94 : vector<8x256xf32>
    %cst_34 = arith.constant 0.322467119 : f32
    %119 = vector.broadcast %cst_34 : f32 to vector<8x256xf32>
    %120 = arith.addf %118, %119 : vector<8x256xf32>
    %121 = arith.mulf %120, %94 : vector<8x256xf32>
    %cst_35 = arith.constant 2.44513416 : f32
    %122 = vector.broadcast %cst_35 : f32 to vector<8x256xf32>
    %123 = arith.addf %121, %122 : vector<8x256xf32>
    %124 = arith.mulf %123, %94 : vector<8x256xf32>
    %cst_36 = arith.constant 3.7544086 : f32
    %125 = vector.broadcast %cst_36 : f32 to vector<8x256xf32>
    %126 = arith.addf %124, %125 : vector<8x256xf32>
    %127 = arith.mulf %126, %94 : vector<8x256xf32>
    %cst_37 = arith.constant 1.000000e+00 : f32
    %128 = vector.broadcast %cst_37 : f32 to vector<8x256xf32>
    %129 = arith.addf %127, %128 : vector<8x256xf32>
    %cst_38 = arith.constant 2.425000e-02 : f32
    %130 = vector.broadcast %cst_38 : f32 to vector<8x256xf32>
    %131 = arith.cmpf olt, %90, %130 : vector<8x256xf32>
    %132 = arith.select %131, %116, %69 : vector<8x256xi1>, vector<8x256xf32>
    %133 = arith.select %131, %129, %85 : vector<8x256xi1>, vector<8x256xf32>
    %134 = arith.divf %132, %133 : vector<8x256xf32>
    %c0_39 = arith.constant 0 : index
    %c0_40 = arith.constant 0 : index
    %135 = vector.load %arg4[%c0_39, %c0_40] : memref<8x256xf32, #tpu.memory_space<vmem>>, vector<8x256xf32>
    %136 = vector.broadcast %1 : f32 to vector<8x256xf32>
    %137 = arith.mulf %134, %136 : vector<8x256xf32>
    %138 = arith.addf %135, %137 : vector<8x256xf32>
    %c0_41 = arith.constant 0 : index
    %c0_42 = arith.constant 0 : index
    %139 = vector.load %arg5[%c0_41, %c0_42] : memref<8x256xf32, #tpu.memory_space<vmem>>, vector<8x256xf32>
    tpu.vector_store %arg5[%c0_41, %c0_42], %138 {strides = array<i32>} : memref<8x256xf32, #tpu.memory_space<vmem>>, vector<8x256xf32>,
    return
  }
  func.func @transform_0(%arg0: i32, %arg1: i32) -> i32 {
    %c0_i32 = arith.constant 0 : i32
    %c0_i32_0 = arith.constant 0 : i32
    return %c0_i32 : i32
  }
  func.func @transform_1(%arg0: i32, %arg1: i32) -> i32 {
    %c0_i32 = arith.constant 0 : i32
    %c0_i32_0 = arith.constant 0 : i32
    return %c0_i32 : i32
  }
  func.func @transform_2(%arg0: i32, %arg1: i32) -> (i32, i32) {
    %c0_i32 = arith.constant 0 : i32
    return %arg0, %arg1 : i32, i32
  }
  func.func @transform_3(%arg0: i32, %arg1: i32) -> (i32, i32) {
    %c0_i32 = arith.constant 0 : i32
    return %arg0, %arg1 : i32, i32
  }
}

</mosaic_0001>

<llo_original>
// kernel: _add_noise.1
$region0: #{_add_noise.1}
  #allocation0 [shape = 'u32[]', space=smem, size = 0x4, offset = 0x4, fixed_abs, tag = 'smem constant byte address 0x4 - core index']
  #allocation1 [shape = 'u32[72,128]{1,0:T(1,128)}', space=vmem, size = 0x9000, scoped, tag = 'internal scratch']
  #allocation2 [shape = 's32[1]{0:T(128)S(6)}', space=smem, size = 0x200, scoped, tag = 'scoped memory for _add_noise.1']
  #allocation3 [shape = 'f32[1]{0:T(128)S(6)}', space=smem, size = 0x200, scoped, tag = 'scoped memory for _add_noise.1']
  %s0 = inlined_call_operand.<no memory space> [shape: s32[1], index: 0, kind: input, shape index: {}]
  %s1 = inlined_call_operand.<no memory space> [shape: f32[1], index: 1, kind: input, shape index: {}]
  %s2 = inlined_call_operand.vmem [shape: f32[8,1024], index: 2, kind: input, shape index: {}]
  %s3 = inlined_call_operand.hbm [shape: f32[8,1024], index: 3, kind: output, shape index: {}]
  %s4 = sld [smem:[#allocation0]]
  $region45: #{_add_noise.1} parent=0
    _
  %s6 = ssub.s32 1, %s4
  %s7 = scalar_select 0, %s6, %s4
  %8 = sst [smem:[#allocation2]] %s0
  %9 = sst [smem:[#allocation3]] %s1
  $region1: #{_add_noise.1} parent=0
    #allocation4 [shape = 'u8[16384]{0}', space=vmem, size = 0x4000, scoped, tag = 'output window, operand 0']
    #allocation5 [shape = 's32[2]{0}', space=sflag, size = 0x8, scoped, tag = 'scoped memory for _add_noise.1']
    %10 = vsyncpa [#allocation5], 0
    %s11 = scalar_lea.sflag [#allocation5], 1
    %12 = vsyncpa %s11, 0
    loop: start=0, step=1, limit=6
    $region2: #{_add_noise.1} parent=1 // loop_pre_header
      _
    $region3: #{_add_noise.1} parent=1 // loop_header
      %s14 = sphi 0, %s18
      %p15 = scmp.ge.s32.totalorder %s14, 6
      %s21 = sphi 0, %s33
      %s22 = sphi 0, %s29
      %s23 = sphi 0, %s21
      %s24 = sphi 0, %s22
      %s25 = sphi 0, %s23
      %s26 = sphi 0, %s24
      %s34 = sphi 0, %s34
      %s36 = sphi 0, %s34
      %s37 = sphi 0, %s36
      %s51 = sphi 0, %s37
      %s55 = sphi 0, %s55
      %s57 = sphi 0, %s55
      %s58 = sphi 0, %s57
      %s72 = sphi 0, %s58
      %s80 = sphi 0, %s82
      %s83 = sphi 0, %s80
      %s84 = sphi 0, %s83
      %s100 = sphi 0, %s84
      %s108 = sphi 0, %s110
      %s111 = sphi 0, %s108
      %s112 = sphi 0, %s111
      %s128 = sphi 0, %s112
    $region4: #{_add_noise.1} parent=1 // loop_header_branch
      %17 = sbr.rel (%p15) target = $region8
    $region5: #{_add_noise.1} parent=1 // loop_body
      %s19 = ssub.s32 %s14, 1
      %s20 = ssub.s32 %s14, 2
      %s27 = sadd.s32 1, %s22
      %p28 = scmp.ge.s32.totalorder %s27, 4
      %s29 = scalar_select %p28, 0, %s27
      %s30 = sadd.s32 1, %s21
      %s31 = scalar_select %p28, %s30, %s21
      %p32 = scmp.ge.s32.totalorder %s31, 1
      %s33 = scalar_select %p32, 0, %s31
      %s35 = sadd.s32 %s34, 1
      %p38 = scmp.eq.s32.totalorder %s14, 3
      %p39 = scmp.ne.s32.totalorder %s34, %s36
      %p40 = scmp.eq.s32.totalorder %s14, 0
      %p41 = por %p39, %p40
      %p42 = scmp.ne.s32.totalorder %s34, %s36
      %p43 = scmp.eq.s32.totalorder %s19, 3
      %p44 = por %p42, %p43
      %p45 = scmp.ne.s32.totalorder %s36, %s37
      %p46 = scmp.eq.s32.totalorder %s19, 0
      %p47 = por %p45, %p46
      %p48 = scmp.ne.s32.totalorder %s36, %s37
      %p49 = scmp.eq.s32.totalorder %s20, 3
      %p50 = por %p48, %p49
      %p52 = scmp.ne.s32.totalorder %s37, %s51
      %p53 = scmp.eq.s32.totalorder %s20, 0
      %p54 = por %p52, %p53
      %s56 = sadd.s32 %s55, 1
      %p59 = scmp.eq.s32.totalorder %s14, 3
      %p60 = scmp.ne.s32.totalorder %s55, %s57
      %p61 = scmp.eq.s32.totalorder %s14, 0
      %p62 = por %p60, %p61
      %p63 = scmp.ne.s32.totalorder %s55, %s57
      %p64 = scmp.eq.s32.totalorder %s19, 3
      %p65 = por %p63, %p64
      %p66 = scmp.ne.s32.totalorder %s57, %s58
      %p67 = scmp.eq.s32.totalorder %s19, 0
      %p68 = por %p66, %p67
      %p69 = scmp.ne.s32.totalorder %s57, %s58
      %p70 = scmp.eq.s32.totalorder %s20, 3
      %p71 = por %p69, %p70
      %p73 = scmp.ne.s32.totalorder %s58, %s72
      %p74 = scmp.eq.s32.totalorder %s20, 0
      %p75 = por %p73, %p74
      %s76 = ssub.s32 %s21, %s33
      %s77 = ssub.s32 %s22, %s29
      %s78 = sor.u32 %s76, %s77
      %p79 = scmp.eq.s32.totalorder %s78, 0
      %s81 = sadd.s32 %s80, 1
      %s82 = scalar_select %p79, %s80, %s81
      %p85 = pneg %p79
      %p86 = scmp.eq.s32.totalorder %s14, 3
      %p87 = por %p85, %p86
      %p88 = scmp.ne.s32.totalorder %s80, %s83
      %p89 = scmp.eq.s32.totalorder %s14, 0
      %p90 = por %p88, %p89
      %p91 = scmp.ne.s32.totalorder %s80, %s83
      %p92 = scmp.eq.s32.totalorder %s19, 3
      %p93 = por %p91, %p92
      %p94 = scmp.ne.s32.totalorder %s83, %s84
      %p95 = scmp.eq.s32.totalorder %s19, 0
      %p96 = por %p94, %p95
      %p97 = scmp.ne.s32.totalorder %s83, %s84
      %p98 = scmp.eq.s32.totalorder %s20, 3
      %p99 = por %p97, %p98
      %p101 = scmp.ne.s32.totalorder %s84, %s100
      %p102 = scmp.eq.s32.totalorder %s20, 0
      %p103 = por %p101, %p102
      %s104 = ssub.s32 %s21, %s33
      %s105 = ssub.s32 %s22, %s29
      %s106 = sor.u32 %s104, %s105
      %p107 = scmp.eq.s32.totalorder %s106, 0
      %s109 = sadd.s32 %s108, 1
      %s110 = scalar_select %p107, %s108, %s109
      %p113 = pneg %p107
      %p114 = scmp.eq.s32.totalorder %s14, 3
      %p115 = por %p113, %p114
      %p116 = scmp.ne.s32.totalorder %s108, %s111
      %p117 = scmp.eq.s32.totalorder %s14, 0
      %p118 = por %p116, %p117
      %p119 = scmp.ne.s32.totalorder %s108, %s111
      %p120 = scmp.eq.s32.totalorder %s19, 3
      %p121 = por %p119, %p120
      %p122 = scmp.ne.s32.totalorder %s111, %s112
      %p123 = scmp.eq.s32.totalorder %s19, 0
      %p124 = por %p122, %p123
      %p125 = scmp.ne.s32.totalorder %s111, %s112
      %p126 = scmp.eq.s32.totalorder %s20, 3
      %p127 = por %p125, %p126
      %p129 = scmp.ne.s32.totalorder %s112, %s128
      %p130 = scmp.eq.s32.totalorder %s20, 0
      %p131 = por %p129, %p130
      %p132 = scmp.le.s32.totalorder 1, %s14
      %p133 = scmp.lt.s32.totalorder %s14, 5
      %p134 = pnand %p132, %p133
      %p135 = pneg %p134
      // Predicated region
      $region9: #{_add_noise.1} parent=5 // pred_check
        _
      $region10: #{_add_noise.1} parent=5 // pred_check_branch
        %137 = sbr.rel (%p134) target = $region12
      $region11: #{_add_noise.1} parent=5 // pred_region
        %s138 = ssub.s32 %s14, 1
        // Predicated region
        $region13: #{_add_noise.1} parent=11 // pred_check
          %p139 = pneg %p47
        $region14: #{_add_noise.1} parent=11 // pred_check_branch
          %141 = sbr.rel (%p139) target = $region16
        $region15: #{_add_noise.1} parent=11 // pred_region
          _
        $region16: #{_add_noise.1} parent=11 // pred_fallthru
          _
        // Predicated region
        $region17: #{_add_noise.1} parent=11 // pred_check
          %p142 = pneg %p68
        $region18: #{_add_noise.1} parent=11 // pred_check_branch
          %144 = sbr.rel (%p142) target = $region20
        $region19: #{_add_noise.1} parent=11 // pred_region
          _
        $region20: #{_add_noise.1} parent=11 // pred_fallthru
          _
      $region12: #{_add_noise.1} parent=5 // pred_fallthru
        _
      %p145 = scmp.lt.s32.totalorder %s14, 4
      // Predicated region
      $region21: #{_add_noise.1} parent=5 // pred_check
        %p146 = pneg %p145
      $region22: #{_add_noise.1} parent=5 // pred_check_branch
        %148 = sbr.rel (%p146) target = $region24
      $region23: #{_add_noise.1} parent=5 // pred_region
        // Predicated region
        $region25: #{_add_noise.1} parent=23 // pred_check
          %p149 = pneg %p90
        $region26: #{_add_noise.1} parent=23 // pred_check_branch
          %151 = sbr.rel (%p149) target = $region28
        $region27: #{_add_noise.1} parent=23 // pred_region
          %s152 = smul.u32 2, %s22
          %p153 = scmp.lt.s32.totalorder %s21, 0
          %s154 = scalar_select %p153, %s21, 0
          %p155 = scmp.lt.s32.totalorder %s152, 7
          %s156 = scalar_select %p155, %s152, 7
          %s157 = smul.addr %s154, 8
          %s158 = sadd.s32 %s156, %s157
          %s159 = smul.addr %s158, 8
          %s160 = scalar_lea.vmem %s2, %s159
          %s161 = smul.u32 2, %s22
        $region28: #{_add_noise.1} parent=23 // pred_fallthru
          _
      $region24: #{_add_noise.1} parent=5 // pred_fallthru
        _
      %p162 = scmp.le.s32.totalorder 1, %s14
      %p163 = scmp.lt.s32.totalorder %s14, 5
      %p164 = pnand %p162, %p163
      %p165 = pneg %p164
      // Predicated region
      $region29: #{_add_noise.1} parent=5 // pred_check
        _
      $region30: #{_add_noise.1} parent=5 // pred_check_branch
        %167 = sbr.rel (%p164) target = $region32
      $region31: #{_add_noise.1} parent=5 // pred_region
        %s168 = ssub.s32 %s14, 1
        %p169 = pneg %p47
        %p170 = pneg %p44
        %p171 = pneg %p68
        %p172 = pneg %p65
        %s173 = smul.u32 2, %s24
        %p174 = scmp.lt.s32.totalorder %s23, 0
        %s175 = scalar_select %p174, %s23, 0
        %p176 = scmp.lt.s32.totalorder %s173, 7
        %s177 = scalar_select %p176, %s173, 7
        %s178 = smul.addr %s175, 8
        %s179 = sadd.s32 %s177, %s178
        %s180 = smul.addr %s179, 8
        %s181 = scalar_lea.vmem %s2, %s180
        %p182 = pneg %p96
        %p183 = pneg %p93
        %p184 = pneg %p124
        %p185 = pneg %p121
        %s186 = sand.u32 %s111, 1
        %s187 = scalar_lea.sflag [#allocation5], %s186
        %s188 = sand.u32 %s111, 1
        %s189 = smul.addr %s188, 16
        %s190 = scalar_lea.vmem [#allocation4], %s189
        %s191 = smul.u32 2, %s24
        %p192 = scmp.lt.s32.totalorder %s23, 0
        %s193 = scalar_select %p192, %s23, 0
        %p194 = scmp.lt.s32.totalorder %s191, 7
        %s195 = scalar_select %p194, %s191, 7
        %s196 = smul.addr %s193, 8
        %s197 = sadd.s32 %s195, %s196
        %s198 = smul.addr %s197, 8
        %s199 = scalar_lea.vmem %s2, %s198
        %s200 = smul.u32 2, %s24
        %s201 = smul.u32 2, %s24
        %s202 = sld [smem:[#allocation2]]
        %s203 = sld [smem:[#allocation3]]
        %v204 = vlaneseq
        %v205 = vshrl.u32 %v204, 7
        %s206 = smul.u32 %s23, 8
        %v207 = vstv %s206
        %v208 = vadd.s32 %v205, %v207
        %v209 = vlaneseq
        %v210 = vand.u32 %v209, 127
        %v211 = vadd.s32 %v210, 128
        %s212 = smul.u32 %s24, 256
        %v213 = vstv %s212
        %v214 = vadd.s32 %v210, %v213
        %v215 = vadd.s32 %v211, %v213
        %v216 = vmul.u32 %v208, 1024
        %v217 = vadd.s32 %v216, %v214
        %v218 = vadd.s32 %v216, %v215
        %v219 = vstv %s202
        %v220 = vxor.u32 %v217, %v219
        %v221 = vxor.u32 %v218, %v219
        %v222 = vshrl.u32 %v220, 16
        %v223 = vshrl.u32 %v221, 16
        %v224 = vxor.u32 %v220, %v222
        %v225 = vxor.u32 %v221, %v223
        %v226 = vmul.u32 %v224, 2146121005
        %v227 = vmul.u32 %v225, 2146121005
        %v228 = vshrl.u32 %v226, 15
        %v229 = vshrl.u32 %v227, 15
        %v230 = vxor.u32 %v226, %v228
        %v231 = vxor.u32 %v227, %v229
        %v232 = vmul.u32 %v230, 2221713035
        %v233 = vmul.u32 %v231, 2221713035
        %v234 = vshrl.u32 %v232, 16
        %v235 = vshrl.u32 %v233, 16
        %v236 = vxor.u32 %v232, %v234
        %v237 = vxor.u32 %v233, %v235
        %v238 = vxor.u32 %v236, 2654435769
        %v239 = vxor.u32 %v237, 2654435769
        %v240 = vshrl.u32 %v238, 16
        %v241 = vshrl.u32 %v239, 16
        %v242 = vxor.u32 %v238, %v240
        %v243 = vxor.u32 %v239, %v241
        %v244 = vmul.u32 %v242, 2146121005
        %v245 = vmul.u32 %v243, 2146121005
        %v246 = vshrl.u32 %v244, 15
        %v247 = vshrl.u32 %v245, 15
        %v248 = vxor.u32 %v244, %v246
        %v249 = vxor.u32 %v245, %v247
        %v250 = vmul.u32 %v248, 2221713035
        %v251 = vmul.u32 %v249, 2221713035
        %v252 = vshrl.u32 %v250, 16
        %v253 = vshrl.u32 %v251, 16
        %v254 = vxor.u32 %v250, %v252
        %v255 = vxor.u32 %v251, %v253
        %v256 = vshrl.u32 %v254, 9
        %v257 = vshrl.u32 %v255, 9
        %v258 = vcvt.s32.f32 %v256
        %v259 = vcvt.s32.f32 %v257
        %v260 = vadd.f32 %v258, 0.5
        %v261 = vadd.f32 %v259, 0.5
        %v262 = vmul.f32 %v260, 1.1920929e-07
        %v263 = vmul.f32 %v261, 1.1920929e-07
        %v264 = vsub.f32 %v262, 0.5
        %v265 = vsub.f32 %v263, 0.5
        %v266 = vmul.f32 %v264, %v264
        %v267 = vmul.f32 %v265, %v265
        %v268 = vmul.f32 %v266, -39.69683
        %v269 = vmul.f32 %v267, -39.69683
        %v270 = vadd.f32 %v268, 220.9461
        %v271 = vadd.f32 %v269, 220.9461
        %v272 = vmul.f32 %v270, %v266
        %v273 = vmul.f32 %v271, %v267
        %v274 = vadd.f32 %v272, -275.9285
        %v275 = vadd.f32 %v273, -275.9285
        %v276 = vmul.f32 %v274, %v266
        %v277 = vmul.f32 %v275, %v267
        %v278 = vadd.f32 %v276, 138.35776
        %v279 = vadd.f32 %v277, 138.35776
        %v280 = vmul.f32 %v278, %v266
        %v281 = vmul.f32 %v279, %v267
        %v282 = vadd.f32 %v280, -30.664799
        %v283 = vadd.f32 %v281, -30.664799
        %v284 = vmul.f32 %v282, %v266
        %v285 = vmul.f32 %v283, %v267
        %v286 = vadd.f32 %v284, 2.5066283
        %v287 = vadd.f32 %v285, 2.5066283
        %v288 = vmul.f32 %v264, %v286
        %v289 = vmul.f32 %v265, %v287
        %v290 = vmul.f32 %v266, -54.476097
        %v291 = vmul.f32 %v267, -54.476097
        %v292 = vadd.f32 %v290, 161.58583
        %v293 = vadd.f32 %v291, 161.58583
        %v294 = vmul.f32 %v292, %v266
        %v295 = vmul.f32 %v293, %v267
        %v296 = vadd.f32 %v294, -155.69897
        %v297 = vadd.f32 %v295, -155.69897
        %v298 = vmul.f32 %v296, %v266
        %v299 = vmul.f32 %v297, %v267
        %v300 = vadd.f32 %v298, 66.801315
        %v301 = vadd.f32 %v299, 66.801315
        %v302 = vmul.f32 %v300, %v266
        %v303 = vmul.f32 %v301, %v267
        %v304 = vadd.f32 %v302, -13.280682
        %v305 = vadd.f32 %v303, -13.280682
        %v306 = vmul.f32 %v304, %v266
        %v307 = vmul.f32 %v305, %v267
        %v308 = vadd.f32 %v306, 1.0
        %v309 = vadd.f32 %v307, 1.0
        %vm310 = vcmp.lt.f32.partialorder %v264, 0.0
        %vm311 = vcmp.lt.f32.partialorder %v265, 0.0
        %v312 = vsub.f32 1.0, %v262
        %v313 = vsub.f32 1.0, %v263
        %v314 = vsel %vm310, %v262, %v312
        %v315 = vsel %vm311, %v263, %v313
        %v316 = vlog2.pop %v314
        %v317 = vmul.f32 %v316, 0.6931472
        %v318 = vlog2.pop %v315
        %v319 = vmul.f32 %v318, 0.6931472
        %v320 = vmul.f32 %v317, -2.0
        %v321 = vmul.f32 %v319, -2.0
        %v322 = vrsqrt.pop %v320
        %v323 = vmul.f32 %v322, %v320
        %v324 = vmul.f32 %v323, %v322
        %v325 = vmul.f32 0.5, %v324
        %v326 = vsub.f32 1.5, %v325
        %v327 = vmul.f32 %v322, %v326
        %v328 = vmul.f32 %v320, %v327
        %vm329 = vcmp.eq.f32.partialorder %v320, inf
        %v330 = vsel %vm329, %v320, %v328
        %vm331 = vcmp.eq.f32.partialorder %v320, 0.0
        %v332 = vand.u32 %v320, 2147483648
        %v333 = vsel %vm331, %v332, %v330
        %v334 = vrsqrt.pop %v321
        %v335 = vmul.f32 %v334, %v321
        %v336 = vmul.f32 %v335, %v334
        %v337 = vmul.f32 0.5, %v336
        %v338 = vsub.f32 1.5, %v337
        %v339 = vmul.f32 %v334, %v338
        %v340 = vmul.f32 %v321, %v339
        %vm341 = vcmp.eq.f32.partialorder %v321, inf
        %v342 = vsel %vm341, %v321, %v340
        %vm343 = vcmp.eq.f32.partialorder %v321, 0.0
        %v344 = vand.u32 %v321, 2147483648
        %v345 = vsel %vm343, %v344, %v342
        %v346 = vsel %vm310, 1.0, -1.0
        %v347 = vsel %vm311, 1.0, -1.0
        %v348 = vmul.f32 %v333, -0.007784894
        %v349 = vmul.f32 %v345, -0.007784894
        %v350 = vadd.f32 %v348, -0.32239646
        %v351 = vadd.f32 %v349, -0.32239646
        %v352 = vmul.f32 %v350, %v333
        %v353 = vmul.f32 %v351, %v345
        %v354 = vadd.f32 %v352, -2.4007583
        %v355 = vadd.f32 %v353, -2.4007583
        %v356 = vmul.f32 %v354, %v333
        %v357 = vmul.f32 %v355, %v345
        %v358 = vadd.f32 %v356, -2.5497324
        %v359 = vadd.f32 %v357, -2.5497324
        %v360 = vmul.f32 %v358, %v333
        %v361 = vmul.f32 %v359, %v345
        %v362 = vadd.f32 %v360, 4.3746643
        %v363 = vadd.f32 %v361, 4.3746643
        %v364 = vmul.f32 %v362, %v333
        %v365 = vmul.f32 %v363, %v345
        %v366 = vadd.f32 %v364, 2.938164
        %v367 = vadd.f32 %v365, 2.938164
        %v368 = vmul.f32 %v346, %v366
        %v369 = vmul.f32 %v347, %v367
        %v370 = vmul.f32 %v333, 0.007784696
        %v371 = vmul.f32 %v345, 0.007784696
        %v372 = vadd.f32 %v370, 0.32246712
        %v373 = vadd.f32 %v371, 0.32246712
        %v374 = vmul.f32 %v372, %v333
        %v375 = vmul.f32 %v373, %v345
        %v376 = vadd.f32 %v374, 2.4451342
        %v377 = vadd.f32 %v375, 2.4451342
        %v378 = vmul.f32 %v376, %v333
        %v379 = vmul.f32 %v377, %v345
        %v380 = vadd.f32 %v378, 3.7544086
        %v381 = vadd.f32 %v379, 3.7544086
        %v382 = vmul.f32 %v380, %v333
        %v383 = vmul.f32 %v381, %v345
        %v384 = vadd.f32 %v382, 1.0
        %v385 = vadd.f32 %v383, 1.0
        %vm386 = vcmp.lt.f32.partialorder %v314, 0.02425
        %vm387 = vcmp.lt.f32.partialorder %v315, 0.02425
        %v388 = vsel %vm386, %v368, %v288
        %v389 = vsel %vm387, %v369, %v289
        %v390 = vsel %vm386, %v384, %v308
        %v391 = vsel %vm387, %v385, %v309
        %v392 = vrcp.pop %v390
        %v393 = vmul.f32 %v390, %v392
        %v394 = vsub.f32 1.0, %v393
        %v395 = vmul.f32 %v392, %v394
        %v396 = vadd.f32 %v392, %v395
        %vm397 = vweird.f32 %v390
        %vm398 = vweird.f32 %v392
        %vm399 = vmor %vm397, %vm398
        %v400 = vsel %vm399, %v392, %v396
        %v401 = vand.u32 2147483647, %v390
        %vm402 = vcmp.eq.f32.partialorder %v401, 8.507059e+37
        %v403 = vand.u32 %v390, 2147483648
        %v404 = vor.u32 1.1754944e-38, %v403
        %v405 = vsel %vm402, %v404, %v400
        %v406 = vmul.f32 %v388, %v405
        %v407 = vrcp.pop %v391
        %v408 = vmul.f32 %v391, %v407
        %v409 = vsub.f32 1.0, %v408
        %v410 = vmul.f32 %v407, %v409
        %v411 = vadd.f32 %v407, %v410
        %vm412 = vweird.f32 %v391
        %vm413 = vweird.f32 %v407
        %vm414 = vmor %vm412, %vm413
        %v415 = vsel %vm414, %v407, %v411
        %v416 = vand.u32 2147483647, %v391
        %vm417 = vcmp.eq.f32.partialorder %v416, 8.507059e+37
        %v418 = vand.u32 %v391, 2147483648
        %v419 = vor.u32 1.1754944e-38, %v418
        %v420 = vsel %vm417, %v419, %v415
        %v421 = vmul.f32 %v389, %v420
        %v422 = vld [vmem:[%s199] sm:$0xff]
        %v423 = vld [vmem:[%s199 + $0x8] sm:$0xff]
        %v424 = vstv %s203
        %v425 = vmul.f32 %v406, %v424
        %v426 = vmul.f32 %v421, %v424
        %v427 = vadd.f32 %v422, %v425
        %v428 = vadd.f32 %v423, %v426
        %429 = vst [vmem:[%s190] sm:$0xff] %v427
        %430 = vst [vmem:[%s190 + $0x8] sm:$0xff] %v428
        %s431 = sand.u32 %s111, 1
        %s432 = scalar_lea.sflag [#allocation5], %s431
        %s433 = sand.u32 %s111, 1
        %s434 = smul.addr %s433, 16
        %s435 = scalar_lea.vmem [#allocation4], %s434
        // Predicated region
        $region33: #{_add_noise.1} parent=31 // pred_check
          %p436 = pneg %p121
        $region34: #{_add_noise.1} parent=31 // pred_check_branch
          %438 = sbr.rel (%p436) target = $region36
        $region35: #{_add_noise.1} parent=31 // pred_region
          %s439 = smul.u32 2, %s24
          %441 = vsyncadd %s432, 0
          %s442 = smul.addr %s23, 8
          %s443 = sadd.s32 %s439, %s442
          %s444 = smul.addr %s443, 8
          %s445 = scalar_lea.hbm %s3, %s444
          %s447 = sshll.u32 %s435, 4
          %s448 = int_to_ptr.vmem [resolvable:$true] %s447
          %s449 = sshll.u32 %s445, 4
          %s450 = int_to_ptr.hbm [resolvable:$true] %s449
          %452 = dma.vmem_to_hbm [thread:$0]  %s448, 256, %s450, %s432
        $region36: #{_add_noise.1} parent=31 // pred_fallthru
          _
      $region32: #{_add_noise.1} parent=5 // pred_fallthru
        _
      %p453 = scmp.le.s32.totalorder 2, %s14
      // Predicated region
      $region37: #{_add_noise.1} parent=5 // pred_check
        %p454 = pneg %p453
      $region38: #{_add_noise.1} parent=5 // pred_check_branch
        %456 = sbr.rel (%p454) target = $region40
      $region39: #{_add_noise.1} parent=5 // pred_region
        %s457 = ssub.s32 %s14, 2
        // Predicated region
        $region41: #{_add_noise.1} parent=39 // pred_check
          %p458 = pneg %p127
        $region42: #{_add_noise.1} parent=39 // pred_check_branch
          %460 = sbr.rel (%p458) target = $region44
        $region43: #{_add_noise.1} parent=39 // pred_region
          %s461 = sand.u32 %s112, 1
          %s462 = scalar_lea.sflag [#allocation5], %s461
          %s463 = sand.u32 %s112, 1
          %s464 = smul.addr %s463, 16
          %s465 = scalar_lea.vmem [#allocation4], %s464
          %467 = dma.done %s462, 256
        $region44: #{_add_noise.1} parent=39 // pred_fallthru
          _
      $region40: #{_add_noise.1} parent=5 // pred_fallthru
        _
    $region6: #{_add_noise.1} parent=1 // loop_footer
      %s18 = sadd.s32 1, %s14
    $region7: #{_add_noise.1} parent=1 // loop_footer_branch
      %13 = sbr.rel target = $region3
    $region8: #{_add_noise.1} parent=1 // loop_exit
      _
    %468 = vsyncpa [#allocation5], 1
    %s469 = scalar_lea.sflag [#allocation5], 1
    %470 = vsyncpa %s469, 1

</llo_original>
